<compile_context>
chip_gen: v7x
topology: tpu7x:2x2x1
jax: 0.10.0
libtpu: 0.0.40
codegen_flags: <defaults>
</compile_context>

<pallas_src>
import jax
import jax.numpy as jnp
from jax.experimental import pallas as pl
from jax.experimental.pallas import tpu as pltpu

RATIO = 16   # ChannelAttentionModule ratio
KSIZE = 7    # SpatialAttentionModule conv kernel size
PAD = 3      # SpatialAttentionModule conv padding


def cbam_kernel(x_ref, w1_ref, w2t_ref, kstack_ref, cb_ref, o_ref):
    """One batch-block: x_ref/o_ref are (B, C, H*W) lane-dense VMEM tiles."""
    x = x_ref[...]                                               # (B, C, HW)
    B, C, HW = x.shape

    # ---------------- channel attention (VPU/XLU only) ----------------
    avg = jnp.sum(x, axis=-1, dtype=jnp.float32) * (1.0 / HW)    # (B, C)  AdaptiveAvgPool2d(1)
    mx = jnp.max(x, axis=-1).astype(jnp.float32)                 # (B, C)  AdaptiveMaxPool2d(1)

    w1 = w1_ref[...].astype(jnp.float32)                         # (Cr, C)
    w2t = w2t_ref[...].astype(jnp.float32)                       # (Cr, C) (= w2.T)

    # shared 1x1-conv MLP as broadcast-multiply + reduce; a (B,C)x(C,Cr) matmul
    # with Cr = C//16 would be near-zero MXU utilization.
    h_avg = jnp.sum(avg[:, None, :] * w1[None, :, :], axis=-1)   # (B, Cr)
    h_max = jnp.sum(mx[:, None, :] * w1[None, :, :], axis=-1)    # (B, Cr)
    g = jnp.maximum(h_avg, 0.0) + jnp.maximum(h_max, 0.0)        # relu(avg)+relu(max)
    y = jnp.sum(g[:, :, None] * w2t[None, :, :], axis=1)         # (B, C)
    ca = jax.nn.sigmoid(y)                                       # (B, C)

    out1 = x * ca.astype(x.dtype)[:, :, None]                    # channel-gated features

    # ---------------- spatial attention ----------------
    mean_map = jnp.sum(out1, axis=1, dtype=jnp.float32) * (1.0 / C)   # (B, HW)
    max_map = jnp.max(out1, axis=1).astype(jnp.float32)               # (B, HW)

    # Zero-padded 7x7 cross-correlation over the 2-channel (mean, max) map,
    # fused into a single lane-dense (B, 2*HW) @ (2*HW, HW) MXU matmul against
    # the stacked conv matrix built in the wrapper. bf16 operands, f32 accumulate.
    lhs = jnp.concatenate([mean_map, max_map], axis=-1).astype(jnp.bfloat16)
    acc = jnp.dot(lhs, kstack_ref[...], preferred_element_type=jnp.float32)
    sa = jax.nn.sigmoid(acc + cb_ref[0])                              # (B, HW)

    o_ref[...] = (out1 * sa.astype(out1.dtype)[:, None, :]).astype(o_ref.dtype)


def _build_conv_matrix(conv_w, H, W):
    """Fold the padded 7x7 cross-correlation into one stacked (2*HW, HW) matrix.

    Returns Kstack (bfloat16) such that for flattened (HW,) maps m (mean) and
    x (max):
        (concat([m, x]) @ Kstack)[h*W + w]
            == conv2d(stack([m2d, x2d]), conv_w, padding=3)[h, w]
    NOTE: this is O((H*W)^2) memory; for large spatial dims switch the in-kernel
    conv to a pltpu.roll-based 49-tap accumulation instead (guarded in wrapper).
    """
    cw = conv_w.astype(jnp.float32)                          # (2, K, K)
    r = jnp.arange(H)
    h = jnp.arange(H)
    c = jnp.arange(W)
    w = jnp.arange(W)
    ki = r[:, None] - h[None, :] + PAD                       # (H_in, H_out)
    kj = c[:, None] - w[None, :] + PAD                       # (W_in, W_out)
    vi = ((ki >= 0) & (ki < KSIZE)).astype(jnp.float32)
    vj = ((kj >= 0) & (kj < KSIZE)).astype(jnp.float32)
    kic = jnp.clip(ki, 0, KSIZE - 1)
    kjc = jnp.clip(kj, 0, KSIZE - 1)
    # wk[ch, r, h, c, w] = cw[ch, ki(r,h), kj(c,w)], masked to valid taps
    wk = cw[:, kic[:, :, None, None], kjc[None, None, :, :]]             # (2,H,H,W,W)
    wk = wk * (vi[:, :, None, None] * vj[None, None, :, :])[None]
    wk = wk.transpose(0, 1, 3, 2, 4).reshape(2, H * W, H * W)            # (ch, in, out)
    kstack = jnp.concatenate([wk[0], wk[1]], axis=0)                     # (2*HW, HW)
    return kstack.astype(jnp.bfloat16)


def _vmem_budget():
    """Pick (block_budget_bytes, vmem_limit_cap_bytes) per TPU generation."""
    try:
        info = pltpu.get_tpu_info()
        vmem_cap = int(getattr(info, "vmem_capacity_bytes", 128 << 20))
    except Exception:
        vmem_cap = 128 << 20
    if vmem_cap <= (96 << 20):
        # v7x-class: 64 MiB physical VMEM per TensorCore.
        return (14 << 20), (48 << 20)
    # v5e / v6e: 128 MiB physical VMEM.
    return (28 << 20), (96 << 20)


def cbam_forward(x, w1, w2, conv_w, conv_b, *, block_n=None):
    N, C, H, W = x.shape
    HW = H * W
    Cr = w1.shape[0]
    itemsize = jnp.dtype(x.dtype).itemsize
    per_img = C * HW * itemsize

    # Guard the dense folded-conv trick: it is O(HW^2) memory and stops fitting
    # VMEM beyond small spatial dims (64x64 would already blow v7x's 64 MiB).
    kstack_bytes = 2 * HW * HW * 2   # bf16 stacked conv matrix
    if kstack_bytes > (16 << 20):
        # TODO(synk): switch to a 49-tap pltpu.roll accumulation (XLU slot) for
        # large H*W instead of the dense (2*HW, HW) matmul.
        raise NotImplementedError(
            f"dense folded 7x7-conv matrix ({kstack_bytes >> 20} MiB) does not "
            "fit VMEM; large spatial dims need a roll-based conv path")

    block_budget, vmem_cap_limit = _vmem_budget()

    # Batch-block many images per grid step (block_n is both the DMA tile batch
    # and the MXU M dim). Guarantee >= 2 grid steps when N >= 2 so v7x can shard
    # the "parallel" axis across both TensorCores; use cdiv so awkward N just
    # gets a masked tail block instead of degrading to block_n=1.
    if block_n is None:
        block_n = max(1, block_budget // per_img)
        if N >= 2:
            block_n = min(block_n, pl.cdiv(N, 2))
        block_n = min(block_n, N)
        if block_n >= 8:
            block_n = (block_n // 8) * 8           # sublane-friendly MXU M dim
    block_n = max(1, min(block_n, N))
    grid_n = pl.cdiv(N, block_n)

    # Lane-dense layout (HW in the lane dim); free contiguous reshape outside.
    x_flat = x.reshape(N, C, HW)
    w2t = jnp.transpose(w2)                                  # (Cr, C)
    kstack = _build_conv_matrix(conv_w, H, W)                # (2*HW, HW) bf16
    cb = conv_b.astype(jnp.float32).reshape(1)

    # Advisory cost + explicit VMEM budget.
    flops = int(N * (2 * (2 * HW) * HW + 8 * C * HW + 4 * C * Cr))
    transcendentals = int(N * (C + HW))
    bytes_accessed = int(2 * N * per_img + kstack_bytes)

    blk_bytes = block_n * per_img
    vmem_est = (4 * blk_bytes                      # in + out, double-buffered
                + 2 * kstack_bytes                 # conv-matrix pipeline buffers
                + 8 * block_n * C * HW * 4         # in-kernel f32 temporaries
                + (4 << 20))                       # headroom
    vmem_limit = int(min(max(vmem_est, 32 << 20), vmem_cap_limit))

    out_flat = pl.pallas_call(
        cbam_kernel,
        out_shape=jax.ShapeDtypeStruct((N, C, HW), x.dtype),
        grid_spec=pltpu.PrefetchScalarGridSpec(
            num_scalar_prefetch=0,
            grid=(grid_n,),
            in_specs=[
                pl.BlockSpec((block_n, C, HW), lambda n: (n, 0, 0)),
                pl.BlockSpec((Cr, C), lambda n: (0, 0)),
                pl.BlockSpec((Cr, C), lambda n: (0, 0)),
                pl.BlockSpec((2 * HW, HW), lambda n: (0, 0)),
                pl.BlockSpec(memory_space=pltpu.MemorySpace.SMEM),
            ],
            out_specs=pl.BlockSpec((block_n, C, HW), lambda n: (n, 0, 0)),
        ),
        compiler_params=pltpu.CompilerParams(
            dimension_semantics=("parallel",),
            vmem_limit_bytes=vmem_limit,
        ),
        cost_estimate=pl.CostEstimate(
            flops=flops,
            transcendentals=transcendentals,
            bytes_accessed=bytes_accessed,
        ),
    )(x_flat, w1, w2t, kstack, cb)

    return out_flat.reshape(N, C, H, W)


def cbam_ref(x, w1, w2, conv_w, conv_b):
    """Pure-JAX f32 reference matching the PyTorch forward semantics."""
    xf = x.astype(jnp.float32)
    avg = jnp.mean(xf, axis=(2, 3))                          # (N, C)
    mx = jnp.max(xf, axis=(2, 3))                            # (N, C)

    def mlp(v):
        return jnp.maximum(v @ w1.T, 0.0) @ w2.T

    ca = jax.nn.sigmoid(mlp(avg) + mlp(mx))                  # (N, C)
    out1 = xf * ca[:, :, None, None]

    mean_map = jnp.mean(out1, axis=1, keepdims=True)
    max_map = jnp.max(out1, axis=1, keepdims=True)
    cat = jnp.concatenate([mean_map, max_map], axis=1)       # (N, 2, H, W)
    conv = jax.lax.conv_general_dilated(
        cat, conv_w.reshape(1, 2, KSIZE, KSIZE),
        window_strides=(1, 1), padding=((PAD, PAD), (PAD, PAD)),
        dimension_numbers=("NCHW", "OIHW", "NCHW"))
    sa = jax.nn.sigmoid(conv + conv_b.reshape(1, 1, 1, 1))   # (N, 1, H, W)
    return out1 * sa


if __name__ == "__main__":
    # Shapes consistent with CBAM(channel=32) (ratio=16 -> hidden=2).
    N, C, H, W = 2, 32, 16, 16
    Cr = C // RATIO

    key = jax.random.PRNGKey(0)
    kx_, k1, k2, k3, k4 = jax.random.split(key, 5)
    x = jax.random.normal(kx_, (N, C, H, W), dtype=jnp.float32)

    # shared_MLP conv1: (C//r, C, 1, 1) no bias ; conv2: (C, C//r, 1, 1) no bias
    # spatial conv2d: (1, 2, 7, 7) with bias (1,)
    w1 = jax.random.normal(k1, (Cr, C), dtype=jnp.float32) * 0.1
    w2 = jax.random.normal(k2, (C, Cr), dtype=jnp.float32) * 0.1
    conv_w = jax.random.normal(k3, (2, KSIZE, KSIZE), dtype=jnp.float32) * 0.05
    conv_b = jax.random.normal(k4, (1,), dtype=jnp.float32) * 0.1

    out = cbam_forward(x, w1, w2, conv_w, conv_b)
    out = jax.block_until_ready(out)

    ref = cbam_ref(x, w1, w2, conv_w, conv_b)
    assert out.shape == (N, C, H, W)
    # Tolerance loosened vs. the pure-f32 path: the spatial-attention logits now
    # go through bf16 MXU operands (f32 accumulate), per the perf review.
    assert jnp.allclose(out, ref, rtol=2e-2, atol=2e-2), (
        float(jnp.max(jnp.abs(out - ref))))

    print("KERNEL_OK")
</pallas_src>

<mosaic_0001>
module attributes {stable_mosaic.version = 11 : i64} {
  func.func @cbam_kernel(%arg0: i32, %arg1: memref<1x32x256xf32, #tpu.memory_space<vmem>>, %arg2: memref<2x32xf32, #tpu.memory_space<vmem>>, %arg3: memref<2x32xf32, #tpu.memory_space<vmem>>, %arg4: memref<512x256xbf16, #tpu.memory_space<vmem>>, %arg5: memref<1xf32, #tpu.memory_space<smem>>, %arg6: memref<1x32x256xf32, #tpu.memory_space<vmem>>) attributes {dimension_semantics = [#tpu.dimension_semantics<parallel>], iteration_bounds = array<i64: 2>, scalar_prefetch = 0 : i64, scratch_operands = 0 : i64, tpu.core_type = #tpu.core_type<tc>, window_params = [{transform_indices = @transform_0, window_bounds = array<i64: 1, 32, 256>}, {pipeline_mode = #tpu.pipeline_mode<synchronous>, transform_indices = @transform_1, window_bounds = array<i64: 2, 32>}, {pipeline_mode = #tpu.pipeline_mode<synchronous>, transform_indices = @transform_2, window_bounds = array<i64: 2, 32>}, {pipeline_mode = #tpu.pipeline_mode<synchronous>, transform_indices = @transform_3, window_bounds = array<i64: 512, 256>}, {transform_indices = @transform_4, window_bounds = array<i64: 1>}, {transform_indices = @transform_5, window_bounds = array<i64: 1, 32, 256>}]} {
    %c0 = arith.constant 0 : index
    %c0_0 = arith.constant 0 : index
    %c0_1 = arith.constant 0 : index
    %0 = vector.load %arg1[%c0, %c0_0, %c0_1] : memref<1x32x256xf32, #tpu.memory_space<vmem>>, vector<1x32x256xf32>
    %cst = arith.constant dense<0.000000e+00> : vector<1x32xf32>
    %1 = vector.multi_reduction <add>, %0, %cst [2] : vector<1x32x256xf32> to vector<1x32xf32>
    %cst_2 = arith.constant 3.906250e-03 : f32
    %2 = vector.broadcast %cst_2 : f32 to vector<1x32xf32>
    %3 = arith.mulf %1, %2 : vector<1x32xf32>
    %cst_3 = arith.constant dense<0xFF800000> : vector<1x32xf32>
    %4 = vector.multi_reduction <maximumf>, %0, %cst_3 [2] : vector<1x32x256xf32> to vector<1x32xf32>
    %c0_4 = arith.constant 0 : index
    %c0_5 = arith.constant 0 : index
    %5 = vector.load %arg2[%c0_4, %c0_5] : memref<2x32xf32, #tpu.memory_space<vmem>>, vector<2x32xf32>
    %c0_6 = arith.constant 0 : index
    %c0_7 = arith.constant 0 : index
    %6 = vector.load %arg3[%c0_6, %c0_7] : memref<2x32xf32, #tpu.memory_space<vmem>>, vector<2x32xf32>
    %7 = vector.shape_cast %3 : vector<1x32xf32> to vector<1x1x32xf32>
    %8 = vector.shape_cast %5 : vector<2x32xf32> to vector<1x2x32xf32>
    %9 = vector.broadcast %7 : vector<1x1x32xf32> to vector<1x2x32xf32>
    %10 = arith.mulf %9, %8 : vector<1x2x32xf32>
    %cst_8 = arith.constant dense<0.000000e+00> : vector<1x2xf32>
    %11 = vector.multi_reduction <add>, %10, %cst_8 [2] : vector<1x2x32xf32> to vector<1x2xf32>
    %12 = vector.shape_cast %4 : vector<1x32xf32> to vector<1x1x32xf32>
    %13 = vector.shape_cast %5 : vector<2x32xf32> to vector<1x2x32xf32>
    %14 = vector.broadcast %12 : vector<1x1x32xf32> to vector<1x2x32xf32>
    %15 = arith.mulf %14, %13 : vector<1x2x32xf32>
    %cst_9 = arith.constant dense<0.000000e+00> : vector<1x2xf32>
    %16 = vector.multi_reduction <add>, %15, %cst_9 [2] : vector<1x2x32xf32> to vector<1x2xf32>
    %cst_10 = arith.constant 0.000000e+00 : f32
    %17 = vector.broadcast %cst_10 : f32 to vector<1x2xf32>
    %18 = arith.maximumf %11, %17 : vector<1x2xf32>
    %cst_11 = arith.constant 0.000000e+00 : f32
    %19 = vector.broadcast %cst_11 : f32 to vector<1x2xf32>
    %20 = arith.maximumf %16, %19 : vector<1x2xf32>
    %21 = arith.addf %18, %20 : vector<1x2xf32>
    %22 = vector.shape_cast %21 : vector<1x2xf32> to vector<1x2x1xf32>
    %23 = vector.shape_cast %6 : vector<2x32xf32> to vector<1x2x32xf32>
    %24 = vector.broadcast %22 : vector<1x2x1xf32> to vector<1x2x32xf32>
    %25 = arith.mulf %24, %23 : vector<1x2x32xf32>
    %cst_12 = arith.constant dense<0.000000e+00> : vector<1x32xf32>
    %26 = vector.multi_reduction <add>, %25, %cst_12 [1] : vector<1x2x32xf32> to vector<1x32xf32>
    %27 = arith.negf %26 : vector<1x32xf32>
    %28 = math.exp %27 : vector<1x32xf32>
    %cst_13 = arith.constant 1.000000e+00 : f32
    %29 = vector.broadcast %cst_13 : f32 to vector<1x32xf32>
    %30 = arith.addf %29, %28 : vector<1x32xf32>
    %31 = arith.divf %29, %30 : vector<1x32xf32>
    %32 = vector.shape_cast %31 : vector<1x32xf32> to vector<1x32x1xf32>
    %33 = vector.broadcast %32 : vector<1x32x1xf32> to vector<1x32x256xf32>
    %34 = arith.mulf %0, %33 : vector<1x32x256xf32>
    %cst_14 = arith.constant dense<0.000000e+00> : vector<1x256xf32>
    %35 = vector.multi_reduction <add>, %34, %cst_14 [1] : vector<1x32x256xf32> to vector<1x256xf32>
    %cst_15 = arith.constant 3.125000e-02 : f32
    %36 = vector.broadcast %cst_15 : f32 to vector<1x256xf32>
    %37 = arith.mulf %35, %36 : vector<1x256xf32>
    %cst_16 = arith.constant dense<0xFF800000> : vector<1x256xf32>
    %38 = vector.multi_reduction <maximumf>, %34, %cst_16 [1] : vector<1x32x256xf32> to vector<1x256xf32>
    %39 = tpu.concatenate %37, %38 in 1 : vector<1x256xf32>, vector<1x256xf32> -> vector<1x512xf32>
    %40 = arith.truncf %39 : vector<1x512xf32> to vector<1x512xbf16>
    %c0_17 = arith.constant 0 : index
    %c0_18 = arith.constant 0 : index
    %41 = vector.load %arg4[%c0_17, %c0_18] : memref<512x256xbf16, #tpu.memory_space<vmem>>, vector<512x256xbf16>
    %cst_19 = arith.constant dense<0.000000e+00> : vector<1x256xf32>
    %42 = tpu.matmul %40, %41, %cst_19 {dimension_numbers = #tpu.dot_dimension_numbers<[1], [0], [0], [1], [0, 0, 1, 1], [], []>} : vector<1x512xbf16>, vector<512x256xbf16>, vector<1x256xf32> -> vector<1x256xf32>
    %c0_20 = arith.constant 0 : index
    %43 = memref.load %arg5[%c0_20] : memref<1xf32, #tpu.memory_space<smem>>
    %44 = vector.broadcast %43 : f32 to vector<1x256xf32>
    %45 = arith.addf %42, %44 : vector<1x256xf32>
    %46 = arith.negf %45 : vector<1x256xf32>
    %47 = math.exp %46 : vector<1x256xf32>
    %cst_21 = arith.constant 1.000000e+00 : f32
    %48 = vector.broadcast %cst_21 : f32 to vector<1x256xf32>
    %49 = arith.addf %48, %47 : vector<1x256xf32>
    %50 = arith.divf %48, %49 : vector<1x256xf32>
    %51 = vector.shape_cast %50 : vector<1x256xf32> to vector<1x1x256xf32>
    %52 = vector.broadcast %51 : vector<1x1x256xf32> to vector<1x32x256xf32>
    %53 = arith.mulf %34, %52 : vector<1x32x256xf32>
    %c0_22 = arith.constant 0 : index
    %c0_23 = arith.constant 0 : index
    %c0_24 = arith.constant 0 : index
    %54 = vector.load %arg6[%c0_22, %c0_23, %c0_24] : memref<1x32x256xf32, #tpu.memory_space<vmem>>, vector<1x32x256xf32>
    tpu.vector_store %arg6[%c0_22, %c0_23, %c0_24], %53 {strides = array<i32>} : memref<1x32x256xf32, #tpu.memory_space<vmem>>, vector<1x32x256xf32>,
    return
  }
  func.func @transform_0(%arg0: i32) -> (i32, i32, i32) {
    %c0_i32 = arith.constant 0 : i32
    %c0_i32_0 = arith.constant 0 : i32
    %c0_i32_1 = arith.constant 0 : i32
    return %arg0, %c0_i32, %c0_i32_0 : i32, i32, i32
  }
  func.func @transform_1(%arg0: i32) -> (i32, i32) {
    %c0_i32 = arith.constant 0 : i32
    %c0_i32_0 = arith.constant 0 : i32
    %c0_i32_1 = arith.constant 0 : i32
    return %c0_i32, %c0_i32_0 : i32, i32
  }
  func.func @transform_2(%arg0: i32) -> (i32, i32) {
    %c0_i32 = arith.constant 0 : i32
    %c0_i32_0 = arith.constant 0 : i32
    %c0_i32_1 = arith.constant 0 : i32
    return %c0_i32, %c0_i32_0 : i32, i32
  }
  func.func @transform_3(%arg0: i32) -> (i32, i32) {
    %c0_i32 = arith.constant 0 : i32
    %c0_i32_0 = arith.constant 0 : i32
    %c0_i32_1 = arith.constant 0 : i32
    return %c0_i32, %c0_i32_0 : i32, i32
  }
  func.func @transform_4(%arg0: i32) -> i32 {
    %c0_i32 = arith.constant 0 : i32
    %c0_i32_0 = arith.constant 0 : i32
    return %c0_i32 : i32
  }
  func.func @transform_5(%arg0: i32) -> (i32, i32, i32) {
    %c0_i32 = arith.constant 0 : i32
    %c0_i32_0 = arith.constant 0 : i32
    %c0_i32_1 = arith.constant 0 : i32
    return %arg0, %c0_i32, %c0_i32_0 : i32, i32, i32
  }
}

</mosaic_0001>

<llo_original>
// kernel: tpu_custom_call.1
$region0: #{tpu_custom_call.1}
  #allocation0 [shape = 'u32[]', space=smem, size = 0x4, offset = 0x4, fixed_abs, tag = 'smem constant byte address 0x4 - core index']
  #allocation1 [shape = 'u32[144,128]{1,0:T(1,128)}', space=vmem, size = 0x12000, scoped, tag = 'internal scratch']
  #allocation2 [shape = 'f32[1]{0:T(128)S(6)}', space=smem, size = 0x200, scoped, tag = 'scoped memory for tpu_custom_call.1']
  %s0 = inlined_call_operand.hbm [shape: f32[2,32,256], index: 0, kind: input, shape index: {}]
  %s1 = inlined_call_operand.vmem [shape: f32[2,32], index: 1, kind: input, shape index: {}]
  %s2 = inlined_call_operand.vmem [shape: f32[2,32], index: 2, kind: input, shape index: {}]
  %s3 = inlined_call_operand.hbm [shape: bf16[512,256], index: 3, kind: input, shape index: {}]
  %s4 = inlined_call_operand.<no memory space> [shape: f32[1], index: 4, kind: input, shape index: {}]
  %s5 = inlined_call_operand.hbm [shape: f32[2,32,256], index: 5, kind: output, shape index: {}]
  %s6 = sld [smem:[#allocation0]]
  $region61: #{tpu_custom_call.1} parent=0
    _
  %s8 = ssub.s32 1, %s6
  %s9 = scalar_select 0, %s8, %s6
  %10 = sst [smem:[#allocation2]] %s4
  $region1: #{tpu_custom_call.1} parent=0
    #allocation3 [shape = 'u8[65536]{0}', space=vmem, size = 0x10000, scoped, tag = 'input window, operand 0']
    #allocation4 [shape = 's32[2]{0}', space=sflag, size = 0x8, scoped, tag = 'scoped memory for tpu_custom_call.1']
    #allocation5 [shape = 's32[2]{0}', space=sflag, size = 0x8, scoped, tag = 'scoped memory for tpu_custom_call.1']
    #allocation6 [shape = 'u8[262144]{0}', space=vmem, size = 0x40000, scoped, tag = 'input window, operand 3, single buffered']
    #allocation7 [shape = 's32[1]{0}', space=sflag, size = 0x4, scoped, tag = 'scoped memory for tpu_custom_call.1']
    #allocation8 [shape = 'u8[65536]{0}', space=vmem, size = 0x10000, scoped, tag = 'output window, operand 0']
    %11 = vsyncpa [#allocation4], 0
    %s12 = scalar_lea.sflag [#allocation4], 1
    %13 = vsyncpa %s12, 0
    %14 = vsyncpa [#allocation7], 0
    %15 = vsyncpa [#allocation5], 0
    %s16 = scalar_lea.sflag [#allocation5], 1
    %17 = vsyncpa %s16, 0
    loop: start=0, step=1, limit=4
    $region2: #{tpu_custom_call.1} parent=1 // loop_pre_header
      _
    $region3: #{tpu_custom_call.1} parent=1 // loop_header
      %s19 = sphi 0, %s23
      %p20 = scmp.ge.s32.totalorder %s19, 4
      %s29 = sphi 0, %s31
      %s32 = sphi 0, %s29
      %s33 = sphi 0, %s32
      %s49 = sphi 0, %s33
      %s53 = sphi 0, %s53
      %s55 = sphi 0, %s53
      %s56 = sphi 0, %s55
      %s70 = sphi 0, %s56
      %s74 = sphi 0, %s74
      %s76 = sphi 0, %s74
      %s77 = sphi 0, %s76
      %s91 = sphi 0, %s77
      %s95 = sphi 0, %s95
      %s97 = sphi 0, %s95
      %s98 = sphi 0, %s97
      %s112 = sphi 0, %s98
      %s116 = sphi 0, %s116
      %s118 = sphi 0, %s116
      %s119 = sphi 0, %s118
      %s133 = sphi 0, %s119
      %s139 = sphi 0, %s141
      %s142 = sphi 0, %s139
      %s143 = sphi 0, %s142
      %s159 = sphi 0, %s143
    $region4: #{tpu_custom_call.1} parent=1 // loop_header_branch
      %22 = sbr.rel (%p20) target = $region8
    $region5: #{tpu_custom_call.1} parent=1 // loop_body
      %s24 = ssub.s32 %s19, 1
      %s25 = ssub.s32 %s19, 2
      %s26 = sadd.s32 %s19, 1
      %s27 = ssub.s32 %s19, %s26
      %p28 = scmp.eq.s32.totalorder %s27, 0
      %s30 = sadd.s32 %s29, 1
      %s31 = scalar_select %p28, %s29, %s30
      %p34 = pneg %p28
      %p35 = scmp.eq.s32.totalorder %s19, 1
      %p36 = por %p34, %p35
      %p37 = scmp.ne.s32.totalorder %s29, %s32
      %p38 = scmp.eq.s32.totalorder %s19, 0
      %p39 = por %p37, %p38
      %p40 = scmp.ne.s32.totalorder %s29, %s32
      %p41 = scmp.eq.s32.totalorder %s24, 1
      %p42 = por %p40, %p41
      %p43 = scmp.ne.s32.totalorder %s32, %s33
      %p44 = scmp.eq.s32.totalorder %s24, 0
      %p45 = por %p43, %p44
      %p46 = scmp.ne.s32.totalorder %s32, %s33
      %p47 = scmp.eq.s32.totalorder %s25, 1
      %p48 = por %p46, %p47
      %p50 = scmp.ne.s32.totalorder %s33, %s49
      %p51 = scmp.eq.s32.totalorder %s25, 0
      %p52 = por %p50, %p51
      %s54 = sadd.s32 %s53, 1
      %p57 = scmp.eq.s32.totalorder %s19, 1
      %p58 = scmp.ne.s32.totalorder %s53, %s55
      %p59 = scmp.eq.s32.totalorder %s19, 0
      %p60 = por %p58, %p59
      %p61 = scmp.ne.s32.totalorder %s53, %s55
      %p62 = scmp.eq.s32.totalorder %s24, 1
      %p63 = por %p61, %p62
      %p64 = scmp.ne.s32.totalorder %s55, %s56
      %p65 = scmp.eq.s32.totalorder %s24, 0
      %p66 = por %p64, %p65
      %p67 = scmp.ne.s32.totalorder %s55, %s56
      %p68 = scmp.eq.s32.totalorder %s25, 1
      %p69 = por %p67, %p68
      %p71 = scmp.ne.s32.totalorder %s56, %s70
      %p72 = scmp.eq.s32.totalorder %s25, 0
      %p73 = por %p71, %p72
      %s75 = sadd.s32 %s74, 1
      %p78 = scmp.eq.s32.totalorder %s19, 1
      %p79 = scmp.ne.s32.totalorder %s74, %s76
      %p80 = scmp.eq.s32.totalorder %s19, 0
      %p81 = por %p79, %p80
      %p82 = scmp.ne.s32.totalorder %s74, %s76
      %p83 = scmp.eq.s32.totalorder %s24, 1
      %p84 = por %p82, %p83
      %p85 = scmp.ne.s32.totalorder %s76, %s77
      %p86 = scmp.eq.s32.totalorder %s24, 0
      %p87 = por %p85, %p86
      %p88 = scmp.ne.s32.totalorder %s76, %s77
      %p89 = scmp.eq.s32.totalorder %s25, 1
      %p90 = por %p88, %p89
      %p92 = scmp.ne.s32.totalorder %s77, %s91
      %p93 = scmp.eq.s32.totalorder %s25, 0
      %p94 = por %p92, %p93
      %s96 = sadd.s32 %s95, 1
      %p99 = scmp.eq.s32.totalorder %s19, 1
      %p100 = scmp.ne.s32.totalorder %s95, %s97
      %p101 = scmp.eq.s32.totalorder %s19, 0
      %p102 = por %p100, %p101
      %p103 = scmp.ne.s32.totalorder %s95, %s97
      %p104 = scmp.eq.s32.totalorder %s24, 1
      %p105 = por %p103, %p104
      %p106 = scmp.ne.s32.totalorder %s97, %s98
      %p107 = scmp.eq.s32.totalorder %s24, 0
      %p108 = por %p106, %p107
      %p109 = scmp.ne.s32.totalorder %s97, %s98
      %p110 = scmp.eq.s32.totalorder %s25, 1
      %p111 = por %p109, %p110
      %p113 = scmp.ne.s32.totalorder %s98, %s112
      %p114 = scmp.eq.s32.totalorder %s25, 0
      %p115 = por %p113, %p114
      %s117 = sadd.s32 %s116, 1
      %p120 = scmp.eq.s32.totalorder %s19, 1
      %p121 = scmp.ne.s32.totalorder %s116, %s118
      %p122 = scmp.eq.s32.totalorder %s19, 0
      %p123 = por %p121, %p122
      %p124 = scmp.ne.s32.totalorder %s116, %s118
      %p125 = scmp.eq.s32.totalorder %s24, 1
      %p126 = por %p124, %p125
      %p127 = scmp.ne.s32.totalorder %s118, %s119
      %p128 = scmp.eq.s32.totalorder %s24, 0
      %p129 = por %p127, %p128
      %p130 = scmp.ne.s32.totalorder %s118, %s119
      %p131 = scmp.eq.s32.totalorder %s25, 1
      %p132 = por %p130, %p131
      %p134 = scmp.ne.s32.totalorder %s119, %s133
      %p135 = scmp.eq.s32.totalorder %s25, 0
      %p136 = por %p134, %p135
      %s137 = ssub.s32 %s19, %s26
      %p138 = scmp.eq.s32.totalorder %s137, 0
      %s140 = sadd.s32 %s139, 1
      %s141 = scalar_select %p138, %s139, %s140
      %p144 = pneg %p138
      %p145 = scmp.eq.s32.totalorder %s19, 1
      %p146 = por %p144, %p145
      %p147 = scmp.ne.s32.totalorder %s139, %s142
      %p148 = scmp.eq.s32.totalorder %s19, 0
      %p149 = por %p147, %p148
      %p150 = scmp.ne.s32.totalorder %s139, %s142
      %p151 = scmp.eq.s32.totalorder %s24, 1
      %p152 = por %p150, %p151
      %p153 = scmp.ne.s32.totalorder %s142, %s143
      %p154 = scmp.eq.s32.totalorder %s24, 0
      %p155 = por %p153, %p154
      %p156 = scmp.ne.s32.totalorder %s142, %s143
      %p157 = scmp.eq.s32.totalorder %s25, 1
      %p158 = por %p156, %p157
      %p160 = scmp.ne.s32.totalorder %s143, %s159
      %p161 = scmp.eq.s32.totalorder %s25, 0
      %p162 = por %p160, %p161
      %p163 = scmp.le.s32.totalorder 1, %s19
      %p164 = scmp.lt.s32.totalorder %s19, 3
      %p165 = pnand %p163, %p164
      %p166 = pneg %p165
      // Predicated region
      $region9: #{tpu_custom_call.1} parent=5 // pred_check
        _
      $region10: #{tpu_custom_call.1} parent=5 // pred_check_branch
        %168 = sbr.rel (%p165) target = $region12
      $region11: #{tpu_custom_call.1} parent=5 // pred_region
        %s169 = ssub.s32 %s19, 1
        // Predicated region
        $region13: #{tpu_custom_call.1} parent=11 // pred_check
          %p170 = pneg %p66
        $region14: #{tpu_custom_call.1} parent=11 // pred_check_branch
          %172 = sbr.rel (%p170) target = $region16
        $region15: #{tpu_custom_call.1} parent=11 // pred_region
          _
        $region16: #{tpu_custom_call.1} parent=11 // pred_fallthru
          _
        // Predicated region
        $region17: #{tpu_custom_call.1} parent=11 // pred_check
          %p173 = pneg %p87
        $region18: #{tpu_custom_call.1} parent=11 // pred_check_branch
          %175 = sbr.rel (%p173) target = $region20
        $region19: #{tpu_custom_call.1} parent=11 // pred_region
          _
        $region20: #{tpu_custom_call.1} parent=11 // pred_fallthru
          _
        // Predicated region
        $region21: #{tpu_custom_call.1} parent=11 // pred_check
          %p176 = pneg %p108
        $region22: #{tpu_custom_call.1} parent=11 // pred_check_branch
          %178 = sbr.rel (%p176) target = $region24
        $region23: #{tpu_custom_call.1} parent=11 // pred_region
          %s180 = ssub.s32 8192, 8192
          %181 = vsyncadd [#allocation7], %s180
          %s182 = sshll.u32 [#allocation6], 4
          %s183 = int_to_ptr.vmem [resolvable:$true] %s182
          %188 = dma.hbm_to_vmem [thread:$0]  %s3, 8192, %s183, [#allocation7], 128, 128, 8
        $region24: #{tpu_custom_call.1} parent=11 // pred_fallthru
          _
        // Predicated region
        $region25: #{tpu_custom_call.1} parent=11 // pred_check
          %p189 = pneg %p129
        $region26: #{tpu_custom_call.1} parent=11 // pred_check_branch
          %191 = sbr.rel (%p189) target = $region28
        $region27: #{tpu_custom_call.1} parent=11 // pred_region
          _
        $region28: #{tpu_custom_call.1} parent=11 // pred_fallthru
          _
      $region12: #{tpu_custom_call.1} parent=5 // pred_fallthru
        _
      %p192 = scmp.lt.s32.totalorder %s19, 2
      // Predicated region
      $region29: #{tpu_custom_call.1} parent=5 // pred_check
        %p193 = pneg %p192
      $region30: #{tpu_custom_call.1} parent=5 // pred_check_branch
        %195 = sbr.rel (%p193) target = $region32
      $region31: #{tpu_custom_call.1} parent=5 // pred_region
        // Predicated region
        $region33: #{tpu_custom_call.1} parent=31 // pred_check
          %p196 = pneg %p39
        $region34: #{tpu_custom_call.1} parent=31 // pred_check_branch
          %198 = sbr.rel (%p196) target = $region36
        $region35: #{tpu_custom_call.1} parent=31 // pred_region
          %s199 = sand.u32 %s29, 1
          %s200 = scalar_lea.sflag [#allocation4], %s199
          %s201 = sand.u32 %s29, 1
          %s202 = smul.addr %s201, 64
          %s203 = scalar_lea.vmem [#allocation3], %s202
          %s205 = ssub.s32 1024, 1024
          %206 = vsyncadd %s200, %s205
          %s207 = smul.addr %s19, 8
          %s208 = smul.addr %s207, 128
          %s209 = scalar_lea.hbm %s0, %s208
          %s210 = sshll.u32 %s203, 4
          %s211 = int_to_ptr.vmem [resolvable:$true] %s210
          %216 = dma.hbm_to_vmem [thread:$0]  %s209, 1024, %s211, %s200, 256, 256, 16
        $region36: #{tpu_custom_call.1} parent=31 // pred_fallthru
          _
      $region32: #{tpu_custom_call.1} parent=5 // pred_fallthru
        _
      %p217 = scmp.le.s32.totalorder 1, %s19
      %p218 = scmp.lt.s32.totalorder %s19, 3
      %p219 = pnand %p217, %p218
      %p220 = pneg %p219
      // Predicated region
      $region37: #{tpu_custom_call.1} parent=5 // pred_check
        _
      $region38: #{tpu_custom_call.1} parent=5 // pred_check_branch
        %222 = sbr.rel (%p219) target = $region40
      $region39: #{tpu_custom_call.1} parent=5 // pred_region
        %s223 = ssub.s32 %s19, 1
        %s224 = sand.u32 %s32, 1
        %s225 = scalar_lea.sflag [#allocation4], %s224
        %s226 = sand.u32 %s32, 1
        %s227 = smul.addr %s226, 64
        %s228 = scalar_lea.vmem [#allocation3], %s227
        // Predicated region
        $region41: #{tpu_custom_call.1} parent=39 // pred_check
          %p229 = pneg %p45
        $region42: #{tpu_custom_call.1} parent=39 // pred_check_branch
          %231 = sbr.rel (%p229) target = $region44
        $region43: #{tpu_custom_call.1} parent=39 // pred_region
          %232 = dma.done %s225, 1024
        $region44: #{tpu_custom_call.1} parent=39 // pred_fallthru
          _
        // Predicated region
        $region45: #{tpu_custom_call.1} parent=39 // pred_check
          %p233 = pneg %p108
        $region46: #{tpu_custom_call.1} parent=39 // pred_check_branch
          %235 = sbr.rel (%p233) target = $region48
        $region47: #{tpu_custom_call.1} parent=39 // pred_region
          %236 = dma.done [#allocation7], 8192
        $region48: #{tpu_custom_call.1} parent=39 // pred_fallthru
          _
        %s237 = sand.u32 %s32, 1
        %s238 = scalar_lea.sflag [#allocation4], %s237
        %s239 = sand.u32 %s32, 1
        %s240 = smul.addr %s239, 64
        %s241 = scalar_lea.vmem [#allocation3], %s240
        %p242 = pneg %p45
        %p243 = pneg %p42
        %p244 = pneg %p66
        %p245 = pneg %p63
        %p246 = pneg %p87
        %p247 = pneg %p84
        %p248 = pneg %p108
        %p249 = pneg %p105
        %p250 = pneg %p129
        %p251 = pneg %p126
        %p252 = pneg %p155
        %p253 = pneg %p152
        %s254 = sand.u32 %s142, 1
        %s255 = scalar_lea.sflag [#allocation5], %s254
        %s256 = sand.u32 %s142, 1
        %s257 = smul.addr %s256, 64
        %s258 = scalar_lea.vmem [#allocation8], %s257
        %v259 = vld [vmem:[%s228] sm:$0xff]
        %v260 = vld [vmem:[%s228 + $0x8] sm:$0xff]
        %v261 = vld [vmem:[%s228 + $0x10] sm:$0xff]
        %v262 = vld [vmem:[%s228 + $0x18] sm:$0xff]
        %v263 = vld [vmem:[%s228 + $0x20] sm:$0xff]
        %v264 = vld [vmem:[%s228 + $0x28] sm:$0xff]
        %v265 = vld [vmem:[%s228 + $0x30] sm:$0xff]
        %v266 = vld [vmem:[%s228 + $0x38] sm:$0xff]
        %v267 = vadd.f32 %v259, %v260
        %268 = vadd.xlane.f32.xlu0 %v267
        %v269 = vpop.xlane.xlu0 %268
        %v270 = vadd.f32 %v261, %v262
        %271 = vadd.xlane.f32.xlu0 %v270
        %v272 = vpop.xlane.xlu0 %271
        %v273 = vadd.f32 %v263, %v264
        %274 = vadd.xlane.f32.xlu0 %v273
        %v275 = vpop.xlane.xlu0 %274
        %v276 = vadd.f32 %v265, %v266
        %277 = vadd.xlane.f32.xlu0 %v276
        %v278 = vpop.xlane.xlu0 %277
        %v279 = vmul.f32 %v269, 0.00390625
        %v280 = vmul.f32 %v272, 0.00390625
        %v281 = vmul.f32 %v275, 0.00390625
        %v282 = vmul.f32 %v278, 0.00390625
        %v283 = vmax.f32 %v259, %v260
        %284 = vmax.xlane.f32.xlu0 %v283
        %v285 = vpop.xlane.xlu0 %284
        %v286 = vmax.f32 %v261, %v262
        %287 = vmax.xlane.f32.xlu0 %v286
        %v288 = vpop.xlane.xlu0 %287
        %v289 = vmax.f32 %v263, %v264
        %290 = vmax.xlane.f32.xlu0 %v289
        %v291 = vpop.xlane.xlu0 %290
        %v292 = vmax.f32 %v265, %v266
        %293 = vmax.xlane.f32.xlu0 %v292
        %v294 = vpop.xlane.xlu0 %293
        %v295 = vld [vmem:[%s1] sm:$0x3]
        %v296 = vld [vmem:[%s2] sm:$0x3]
        %v298 = vlaneseq
        %v299 = vshrl.u32 %v298, 7
        %v300 = vsub.s32 0, %v299
        %v301 = vrot.slane %v295, %v300
        %303 = vbcast.lane.b32.xlu0 %v301, 256
        %v304 = vpop.permute.xlu0 %303
        %s306 = sor.u32 256, 8
        %307 = vbcast.lane.b32.xlu0 %v301, %s306
        %v308 = vpop.permute.xlu0 %307
        %s310 = sor.u32 256, 16
        %311 = vbcast.lane.b32.xlu0 %v301, %s310
        %v312 = vpop.permute.xlu0 %311
        %s314 = sor.u32 256, 24
        %315 = vbcast.lane.b32.xlu0 %v301, %s314
        %v316 = vpop.permute.xlu0 %315
        %v317 = vlaneseq
        %v318 = vshrl.u32 %v317, 7
        %v319 = vsub.s32 1, %v318
        %v320 = vrot.slane %v295, %v319
        %322 = vbcast.lane.b32.xlu0 %v320, 256
        %v323 = vpop.permute.xlu0 %322
        %s325 = sor.u32 256, 8
        %326 = vbcast.lane.b32.xlu0 %v320, %s325
        %v327 = vpop.permute.xlu0 %326
        %s329 = sor.u32 256, 16
        %330 = vbcast.lane.b32.xlu0 %v320, %s329
        %v331 = vpop.permute.xlu0 %330
        %s333 = sor.u32 256, 24
        %334 = vbcast.lane.b32.xlu0 %v320, %s333
        %v335 = vpop.permute.xlu0 %334
        %v344 = vmul.f32 %v279, %v304
        %v345 = vmul.f32 %v280, %v308
        %v346 = vmul.f32 %v281, %v312
        %v347 = vmul.f32 %v282, %v316
        %v348 = vmul.f32 %v279, %v323
        %v349 = vmul.f32 %v280, %v327
        %v350 = vmul.f32 %v281, %v331
        %v351 = vmul.f32 %v282, %v335
        %360 = vset.pattern.permute.xlu0 0
        %361 = vperm.xlu0 %360, %v344
        %v362 = vpop.permute.xlu0 %361
        %363 = vset.pattern.permute.xlu0 0
        %364 = vperm.xlu0 %363, %v345
        %v365 = vpop.permute.xlu0 %364
        %366 = vset.pattern.permute.xlu0 0
        %367 = vperm.xlu0 %366, %v346
        %v368 = vpop.permute.xlu0 %367
        %369 = vset.pattern.permute.xlu0 0
        %370 = vperm.xlu0 %369, %v347
        %v371 = vpop.permute.xlu0 %370
        %372 = vset.pattern.permute.xlu0 0
        %373 = vperm.xlu0 %372, %v348
        %v374 = vpop.permute.xlu0 %373
        %375 = vset.pattern.permute.xlu0 0
        %376 = vperm.xlu0 %375, %v349
        %v377 = vpop.permute.xlu0 %376
        %378 = vset.pattern.permute.xlu0 0
        %379 = vperm.xlu0 %378, %v350
        %v380 = vpop.permute.xlu0 %379
        %381 = vset.pattern.permute.xlu0 0
        %382 = vperm.xlu0 %381, %v351
        %v383 = vpop.permute.xlu0 %382
        %v384 = vlaneseq
        %v385 = vand.u32 %v384, 127
        %v386 = vlaneseq
        %v387 = vshrl.u32 %v386, 7
        %v388 = vsub.s32 %v385, %v387
        %v389 = vrot.slane %v362, %v388
        %v390 = vadd.s32 %v385, 4294967288
        %v391 = vlaneseq
        %v392 = vshrl.u32 %v391, 7
        %v393 = vsub.s32 %v390, %v392
        %v394 = vrot.slane %v365, %v393
        %vm395 = vcmask 130112
        %v396 = vsel %vm395, %v394, %v389
        %v397 = vadd.s32 %v385, 4294967280
        %v398 = vlaneseq
        %v399 = vshrl.u32 %v398, 7
        %v400 = vsub.s32 %v397, %v399
        %v401 = vrot.slane %v368, %v400
        %vm402 = vcmask 195712
        %v403 = vsel %vm402, %v401, %v396
        %v404 = vadd.s32 %v385, 4294967272
        %v405 = vlaneseq
        %v406 = vshrl.u32 %v405, 7
        %v407 = vsub.s32 %v404, %v406
        %v408 = vrot.slane %v371, %v407
        %vm409 = vcmask 261312
        %v410 = vsel %vm409, %v408, %v403
        %v411 = vlaneseq
        %v412 = vshrl.u32 %v411, 7
        %v413 = vsub.s32 %v385, %v412
        %v414 = vrot.slane %v374, %v413
        %v415 = vlaneseq
        %v416 = vshrl.u32 %v415, 7
        %v417 = vsub.s32 %v390, %v416
        %v418 = vrot.slane %v377, %v417
        %v419 = vsel %vm395, %v418, %v414
        %v420 = vlaneseq
        %v421 = vshrl.u32 %v420, 7
        %v422 = vsub.s32 %v397, %v421
        %v423 = vrot.slane %v380, %v422
        %v424 = vsel %vm402, %v423, %v419
        %v425 = vlaneseq
        %v426 = vshrl.u32 %v425, 7
        %v427 = vsub.s32 %v404, %v426
        %v428 = vrot.slane %v383, %v427
        %v429 = vsel %vm409, %v428, %v424
        %vm430 = vcmask 1041409
        %v431 = vsel %vm430, %v429, %v410
        %vm433 = vcmask 254976
        %v434 = vsel %vm433, %v431, 0.0
        %435 = vadd.xlane.f32.xlu0 %v434
        %v436 = vpop.xlane.xlu0 %435
        %v437 = vmul.f32 %v285, %v304
        %v438 = vmul.f32 %v288, %v308
        %v439 = vmul.f32 %v291, %v312
        %v440 = vmul.f32 %v294, %v316
        %v441 = vmul.f32 %v285, %v323
        %v442 = vmul.f32 %v288, %v327
        %v443 = vmul.f32 %v291, %v331
        %v444 = vmul.f32 %v294, %v335
        %453 = vset.pattern.permute.xlu0 0
        %454 = vperm.xlu0 %453, %v437
        %v455 = vpop.permute.xlu0 %454
        %456 = vset.pattern.permute.xlu0 0
        %457 = vperm.xlu0 %456, %v438
        %v458 = vpop.permute.xlu0 %457
        %459 = vset.pattern.permute.xlu0 0
        %460 = vperm.xlu0 %459, %v439
        %v461 = vpop.permute.xlu0 %460
        %462 = vset.pattern.permute.xlu0 0
        %463 = vperm.xlu0 %462, %v440
        %v464 = vpop.permute.xlu0 %463
        %465 = vset.pattern.permute.xlu0 0
        %466 = vperm.xlu0 %465, %v441
        %v467 = vpop.permute.xlu0 %466
        %468 = vset.pattern.permute.xlu0 0
        %469 = vperm.xlu0 %468, %v442
        %v470 = vpop.permute.xlu0 %469
        %471 = vset.pattern.permute.xlu0 0
        %472 = vperm.xlu0 %471, %v443
        %v473 = vpop.permute.xlu0 %472
        %474 = vset.pattern.permute.xlu0 0
        %475 = vperm.xlu0 %474, %v444
        %v476 = vpop.permute.xlu0 %475
        %v477 = vlaneseq
        %v478 = vshrl.u32 %v477, 7
        %v479 = vsub.s32 %v385, %v478
        %v480 = vrot.slane %v455, %v479
        %v481 = vlaneseq
        %v482 = vshrl.u32 %v481, 7
        %v483 = vsub.s32 %v390, %v482
        %v484 = vrot.slane %v458, %v483
        %v485 = vsel %vm395, %v484, %v480
        %v486 = vlaneseq
        %v487 = vshrl.u32 %v486, 7
        %v488 = vsub.s32 %v397, %v487
        %v489 = vrot.slane %v461, %v488
        %v490 = vsel %vm402, %v489, %v485
        %v491 = vlaneseq
        %v492 = vshrl.u32 %v491, 7
        %v493 = vsub.s32 %v404, %v492
        %v494 = vrot.slane %v464, %v493
        %v495 = vsel %vm409, %v494, %v490
        %v496 = vlaneseq
        %v497 = vshrl.u32 %v496, 7
        %v498 = vsub.s32 %v385, %v497
        %v499 = vrot.slane %v467, %v498
        %v500 = vlaneseq
        %v501 = vshrl.u32 %v500, 7
        %v502 = vsub.s32 %v390, %v501
        %v503 = vrot.slane %v470, %v502
        %v504 = vsel %vm395, %v503, %v499
        %v505 = vlaneseq
        %v506 = vshrl.u32 %v505, 7
        %v507 = vsub.s32 %v397, %v506
        %v508 = vrot.slane %v473, %v507
        %v509 = vsel %vm402, %v508, %v504
        %v510 = vlaneseq
        %v511 = vshrl.u32 %v510, 7
        %v512 = vsub.s32 %v404, %v511
        %v513 = vrot.slane %v476, %v512
        %v514 = vsel %vm409, %v513, %v509
        %v515 = vsel %vm430, %v514, %v495
        %v517 = vsel %vm433, %v515, 0.0
        %518 = vadd.xlane.f32.xlu0 %v517
        %v519 = vpop.xlane.xlu0 %518
        %v520 = vmax.f32 %v436, 0.0
        %v521 = vmax.f32 %v519, 0.0
        %v522 = vadd.f32 %v520, %v521
        %v523 = vmul.f32 %v522, %v296
        %v524 = vsel %vm433, %v523, 0.0
        %v525 = vrot.slane %v524, 4
        %v526 = vadd.f32 %v524, %v525
        %v527 = vrot.slane %v526, 2
        %v528 = vadd.f32 %v526, %v527
        %v529 = vrot.slane %v528, 1
        %v530 = vadd.f32 %v528, %v529
        %v531 = vxor.u32 %v530, 2147483648
        %v532 = vmul.f32 %v531, 1.442695
        %v533 = vpow.pop %v532
        %v534 = vadd.f32 %v533, 1.0
        %v535 = vrcp.pop %v534
        %v536 = vmul.f32 1.0, %v535
        %538 = vbcast.lane.b32.xlu0 %v536, 256
        %v539 = vpop.permute.xlu0 %538
        %s541 = sor.u32 256, 8
        %542 = vbcast.lane.b32.xlu0 %v536, %s541
        %v543 = vpop.permute.xlu0 %542
        %s545 = sor.u32 256, 16
        %546 = vbcast.lane.b32.xlu0 %v536, %s545
        %v547 = vpop.permute.xlu0 %546
        %s549 = sor.u32 256, 24
        %550 = vbcast.lane.b32.xlu0 %v536, %s549
        %v551 = vpop.permute.xlu0 %550
        %v552 = vmul.f32 %v259, %v539
        %v553 = vmul.f32 %v260, %v539
        %v554 = vmul.f32 %v261, %v543
        %v555 = vmul.f32 %v262, %v543
        %v556 = vmul.f32 %v263, %v547
        %v557 = vmul.f32 %v264, %v547
        %v558 = vmul.f32 %v265, %v551
        %v559 = vmul.f32 %v266, %v551
        %v560 = vadd.f32 %v552, %v554
        %v561 = vadd.f32 %v560, %v556
        %v562 = vadd.f32 %v561, %v558
        %v563 = vrot.slane %v562, 4
        %v564 = vadd.f32 %v562, %v563
        %v565 = vrot.slane %v564, 2
        %v566 = vadd.f32 %v564, %v565
        %v567 = vrot.slane %v566, 1
        %v568 = vadd.f32 %v566, %v567
        %v569 = vadd.f32 %v553, %v555
        %v570 = vadd.f32 %v569, %v557
        %v571 = vadd.f32 %v570, %v559
        %v572 = vrot.slane %v571, 4
        %v573 = vadd.f32 %v571, %v572
        %v574 = vrot.slane %v573, 2
        %v575 = vadd.f32 %v573, %v574
        %v576 = vrot.slane %v575, 1
        %v577 = vadd.f32 %v575, %v576
        %v578 = vmul.f32 %v568, 0.03125
        %v579 = vmul.f32 %v577, 0.03125
        %v580 = vmax.f32 %v552, %v556
        %v581 = vmax.f32 %v554, %v558
        %v582 = vmax.f32 %v580, %v581
        %v583 = vrot.slane %v582, 4
        %v584 = vmax.f32 %v582, %v583
        %v585 = vrot.slane %v584, 2
        %v586 = vmax.f32 %v584, %v585
        %v587 = vrot.slane %v586, 1
        %v588 = vmax.f32 %v586, %v587
        %v589 = vmax.f32 %v553, %v557
        %v590 = vmax.f32 %v555, %v559
        %v591 = vmax.f32 %v589, %v590
        %v592 = vrot.slane %v591, 4
        %v593 = vmax.f32 %v591, %v592
        %v594 = vrot.slane %v593, 2
        %v595 = vmax.f32 %v593, %v594
        %v596 = vrot.slane %v595, 1
        %v597 = vmax.f32 %v595, %v596
        %v598 = vpack.c.bf16 %v578, %v578
        %v599 = vpack.c.bf16 %v579, %v579
        %v600 = vpack.c.bf16 %v588, %v588
        %v601 = vpack.c.bf16 %v597, %v597
        %v602 = vld [vmem:[#allocation6] sm:$0xff]
        %v603 = vld [vmem:[#allocation6 + $0x8] sm:$0xff]
        %v604 = vld [vmem:[#allocation6 + $0x10] sm:$0xff]
        %v605 = vld [vmem:[#allocation6 + $0x18] sm:$0xff]
        %v606 = vld [vmem:[#allocation6 + $0x20] sm:$0xff]
        %v607 = vld [vmem:[#allocation6 + $0x28] sm:$0xff]
        %v608 = vld [vmem:[#allocation6 + $0x30] sm:$0xff]
        %v609 = vld [vmem:[#allocation6 + $0x38] sm:$0xff]
        %v610 = vld [vmem:[#allocation6 + $0x40] sm:$0xff]
        %v611 = vld [vmem:[#allocation6 + $0x48] sm:$0xff]
        %v612 = vld [vmem:[#allocation6 + $0x50] sm:$0xff]
        %v613 = vld [vmem:[#allocation6 + $0x58] sm:$0xff]
        %v614 = vld [vmem:[#allocation6 + $0x60] sm:$0xff]
        %v615 = vld [vmem:[#allocation6 + $0x68] sm:$0xff]
        %v616 = vld [vmem:[#allocation6 + $0x70] sm:$0xff]
        %v617 = vld [vmem:[#allocation6 + $0x78] sm:$0xff]
        %v618 = vld [vmem:[#allocation6 + $0x80] sm:$0xff]
        %v619 = vld [vmem:[#allocation6 + $0x88] sm:$0xff]
        %v620 = vld [vmem:[#allocation6 + $0x90] sm:$0xff]
        %v621 = vld [vmem:[#allocation6 + $0x98] sm:$0xff]
        %v622 = vld [vmem:[#allocation6 + $0xa0] sm:$0xff]
        %v623 = vld [vmem:[#allocation6 + $0xa8] sm:$0xff]
        %v624 = vld [vmem:[#allocation6 + $0xb0] sm:$0xff]
        %v625 = vld [vmem:[#allocation6 + $0xb8] sm:$0xff]
        %v626 = vld [vmem:[#allocation6 + $0xc0] sm:$0xff]
        %v627 = vld [vmem:[#allocation6 + $0xc8] sm:$0xff]
        %v628 = vld [vmem:[#allocation6 + $0xd0] sm:$0xff]
        %v629 = vld [vmem:[#allocation6 + $0xd8] sm:$0xff]
        %v630 = vld [vmem:[#allocation6 + $0xe0] sm:$0xff]
        %v631 = vld [vmem:[#allocation6 + $0xe8] sm:$0xff]
        %v632 = vld [vmem:[#allocation6 + $0xf0] sm:$0xff]
        %v633 = vld [vmem:[#allocation6 + $0xf8] sm:$0xff]
        %v634 = vld [vmem:[#allocation6 + $0x100] sm:$0xff]
        %v635 = vld [vmem:[#allocation6 + $0x108] sm:$0xff]
        %v636 = vld [vmem:[#allocation6 + $0x110] sm:$0xff]
        %v637 = vld [vmem:[#allocation6 + $0x118] sm:$0xff]
        %v638 = vld [vmem:[#allocation6 + $0x120] sm:$0xff]
        %v639 = vld [vmem:[#allocation6 + $0x128] sm:$0xff]
        %v640 = vld [vmem:[#allocation6 + $0x130] sm:$0xff]
        %v641 = vld [vmem:[#allocation6 + $0x138] sm:$0xff]
        %v642 = vld [vmem:[#allocation6 + $0x140] sm:$0xff]
        %v643 = vld [vmem:[#allocation6 + $0x148] sm:$0xff]
        %v644 = vld [vmem:[#allocation6 + $0x150] sm:$0xff]
        %v645 = vld [vmem:[#allocation6 + $0x158] sm:$0xff]
        %v646 = vld [vmem:[#allocation6 + $0x160] sm:$0xff]
        %v647 = vld [vmem:[#allocation6 + $0x168] sm:$0xff]
        %v648 = vld [vmem:[#allocation6 + $0x170] sm:$0xff]
        %v649 = vld [vmem:[#allocation6 + $0x178] sm:$0xff]
        %v650 = vld [vmem:[#allocation6 + $0x180] sm:$0xff]
        %v651 = vld [vmem:[#allocation6 + $0x188] sm:$0xff]
        %v652 = vld [vmem:[#allocation6 + $0x190] sm:$0xff]
        %v653 = vld [vmem:[#allocation6 + $0x198] sm:$0xff]
        %v654 = vld [vmem:[#allocation6 + $0x1a0] sm:$0xff]
        %v655 = vld [vmem:[#allocation6 + $0x1a8] sm:$0xff]
        %v656 = vld [vmem:[#allocation6 + $0x1b0] sm:$0xff]
        %v657 = vld [vmem:[#allocation6 + $0x1b8] sm:$0xff]
        %v658 = vld [vmem:[#allocation6 + $0x1c0] sm:$0xff]
        %v659 = vld [vmem:[#allocation6 + $0x1c8] sm:$0xff]
        %v660 = vld [vmem:[#allocation6 + $0x1d0] sm:$0xff]
        %v661 = vld [vmem:[#allocation6 + $0x1d8] sm:$0xff]
        %v662 = vld [vmem:[#allocation6 + $0x1e0] sm:$0xff]
        %v663 = vld [vmem:[#allocation6 + $0x1e8] sm:$0xff]
        %v664 = vld [vmem:[#allocation6 + $0x1f0] sm:$0xff]
        %v665 = vld [vmem:[#allocation6 + $0x1f8] sm:$0xff]
        %s666 = sld [smem:[#allocation2]]
        %v667 = vstv %s666
        %v732 = vunpack.c.l.b16 %v602
        %v733 = vunpack.c.h.b16 %v602
        %v734 = vunpack.c.l.b16 %v603
        %v735 = vunpack.c.h.b16 %v603
        %v736 = vunpack.c.l.b16 %v604
        %v737 = vunpack.c.h.b16 %v604
        %v738 = vunpack.c.l.b16 %v605
        %v739 = vunpack.c.h.b16 %v605
        %v740 = vunpack.c.l.b16 %v606
        %v741 = vunpack.c.h.b16 %v606
        %v742 = vunpack.c.l.b16 %v607
        %v743 = vunpack.c.h.b16 %v607
        %v744 = vunpack.c.l.b16 %v608
        %v745 = vunpack.c.h.b16 %v608
        %v746 = vunpack.c.l.b16 %v609
        %v747 = vunpack.c.h.b16 %v609
        %v748 = vunpack.c.l.b16 %v610
        %v749 = vunpack.c.h.b16 %v610
        %v750 = vunpack.c.l.b16 %v611
        %v751 = vunpack.c.h.b16 %v611
        %v752 = vunpack.c.l.b16 %v612
        %v753 = vunpack.c.h.b16 %v612
        %v754 = vunpack.c.l.b16 %v613
        %v755 = vunpack.c.h.b16 %v613
        %v756 = vunpack.c.l.b16 %v614
        %v757 = vunpack.c.h.b16 %v614
        %v758 = vunpack.c.l.b16 %v615
        %v759 = vunpack.c.h.b16 %v615
        %v760 = vunpack.c.l.b16 %v616
        %v761 = vunpack.c.h.b16 %v616
        %v762 = vunpack.c.l.b16 %v617
        %v763 = vunpack.c.h.b16 %v617
        %v764 = vunpack.c.l.b16 %v618
        %v765 = vunpack.c.h.b16 %v618
        %v766 = vunpack.c.l.b16 %v619
        %v767 = vunpack.c.h.b16 %v619
        %v768 = vunpack.c.l.b16 %v620
        %v769 = vunpack.c.h.b16 %v620
        %v770 = vunpack.c.l.b16 %v621
        %v771 = vunpack.c.h.b16 %v621
        %v772 = vunpack.c.l.b16 %v622
        %v773 = vunpack.c.h.b16 %v622
        %v774 = vunpack.c.l.b16 %v623
        %v775 = vunpack.c.h.b16 %v623
        %v776 = vunpack.c.l.b16 %v624
        %v777 = vunpack.c.h.b16 %v624
        %v778 = vunpack.c.l.b16 %v625
        %v779 = vunpack.c.h.b16 %v625
        %v780 = vunpack.c.l.b16 %v626
        %v781 = vunpack.c.h.b16 %v626
        %v782 = vunpack.c.l.b16 %v627
        %v783 = vunpack.c.h.b16 %v627
        %v784 = vunpack.c.l.b16 %v628
        %v785 = vunpack.c.h.b16 %v628
        %v786 = vunpack.c.l.b16 %v629
        %v787 = vunpack.c.h.b16 %v629
        %v788 = vunpack.c.l.b16 %v630
        %v789 = vunpack.c.h.b16 %v630
        %v790 = vunpack.c.l.b16 %v631
        %v791 = vunpack.c.h.b16 %v631
        %v792 = vunpack.c.l.b16 %v632
        %v793 = vunpack.c.h.b16 %v632
        %v794 = vunpack.c.l.b16 %v633
        %v795 = vunpack.c.h.b16 %v633
        %v796 = vunpack.c.l.b16 %v634
        %v797 = vunpack.c.h.b16 %v634
        %v798 = vunpack.c.l.b16 %v635
        %v799 = vunpack.c.h.b16 %v635
        %v800 = vunpack.c.l.b16 %v636
        %v801 = vunpack.c.h.b16 %v636
        %v802 = vunpack.c.l.b16 %v637
        %v803 = vunpack.c.h.b16 %v637
        %v804 = vunpack.c.l.b16 %v638
        %v805 = vunpack.c.h.b16 %v638
        %v806 = vunpack.c.l.b16 %v639
        %v807 = vunpack.c.h.b16 %v639
        %v808 = vunpack.c.l.b16 %v640
        %v809 = vunpack.c.h.b16 %v640
        %v810 = vunpack.c.l.b16 %v641
        %v811 = vunpack.c.h.b16 %v641
        %v812 = vunpack.c.l.b16 %v642
        %v813 = vunpack.c.h.b16 %v642
        %v814 = vunpack.c.l.b16 %v643
        %v815 = vunpack.c.h.b16 %v643
        %v816 = vunpack.c.l.b16 %v644
        %v817 = vunpack.c.h.b16 %v644
        %v818 = vunpack.c.l.b16 %v645
        %v819 = vunpack.c.h.b16 %v645
        %v820 = vunpack.c.l.b16 %v646
        %v821 = vunpack.c.h.b16 %v646
        %v822 = vunpack.c.l.b16 %v647
        %v823 = vunpack.c.h.b16 %v647
        %v824 = vunpack.c.l.b16 %v648
        %v825 = vunpack.c.h.b16 %v648
        %v826 = vunpack.c.l.b16 %v649
        %v827 = vunpack.c.h.b16 %v649
        %v828 = vunpack.c.l.b16 %v650
        %v829 = vunpack.c.h.b16 %v650
        %v830 = vunpack.c.l.b16 %v651
        %v831 = vunpack.c.h.b16 %v651
        %v832 = vunpack.c.l.b16 %v652
        %v833 = vunpack.c.h.b16 %v652
        %v834 = vunpack.c.l.b16 %v653
        %v835 = vunpack.c.h.b16 %v653
        %v836 = vunpack.c.l.b16 %v654
        %v837 = vunpack.c.h.b16 %v654
        %v838 = vunpack.c.l.b16 %v655
        %v839 = vunpack.c.h.b16 %v655
        %v840 = vunpack.c.l.b16 %v656
        %v841 = vunpack.c.h.b16 %v656
        %v842 = vunpack.c.l.b16 %v657
        %v843 = vunpack.c.h.b16 %v657
        %v844 = vunpack.c.l.b16 %v658
        %v845 = vunpack.c.h.b16 %v658
        %v846 = vunpack.c.l.b16 %v659
        %v847 = vunpack.c.h.b16 %v659
        %v848 = vunpack.c.l.b16 %v660
        %v849 = vunpack.c.h.b16 %v660
        %v850 = vunpack.c.l.b16 %v661
        %v851 = vunpack.c.h.b16 %v661
        %v852 = vunpack.c.l.b16 %v662
        %v853 = vunpack.c.h.b16 %v662
        %v854 = vunpack.c.l.b16 %v663
        %v855 = vunpack.c.h.b16 %v663
        %v856 = vunpack.c.l.b16 %v664
        %v857 = vunpack.c.h.b16 %v664
        %v858 = vunpack.c.l.b16 %v665
        %v859 = vunpack.c.h.b16 %v665
        %v860 = vpack.c.b16 %v734, %v732
        %v861 = vpack.c.b16 %v735, %v733
        %v862 = vpack.c.b16 %v738, %v736
        %v863 = vpack.c.b16 %v739, %v737
        %v864 = vpack.c.b16 %v742, %v740
        %v865 = vpack.c.b16 %v743, %v741
        %v866 = vpack.c.b16 %v746, %v744
        %v867 = vpack.c.b16 %v747, %v745
        %v868 = vpack.c.b16 %v750, %v748
        %v869 = vpack.c.b16 %v751, %v749
        %v870 = vpack.c.b16 %v754, %v752
        %v871 = vpack.c.b16 %v755, %v753
        %v872 = vpack.c.b16 %v758, %v756
        %v873 = vpack.c.b16 %v759, %v757
        %v874 = vpack.c.b16 %v762, %v760
        %v875 = vpack.c.b16 %v763, %v761
        %v876 = vpack.c.b16 %v766, %v764
        %v877 = vpack.c.b16 %v767, %v765
        %v878 = vpack.c.b16 %v770, %v768
        %v879 = vpack.c.b16 %v771, %v769
        %v880 = vpack.c.b16 %v774, %v772
        %v881 = vpack.c.b16 %v775, %v773
        %v882 = vpack.c.b16 %v778, %v776
        %v883 = vpack.c.b16 %v779, %v777
        %v884 = vpack.c.b16 %v782, %v780
        %v885 = vpack.c.b16 %v783, %v781
        %v886 = vpack.c.b16 %v786, %v784
        %v887 = vpack.c.b16 %v787, %v785
        %v888 = vpack.c.b16 %v790, %v788
        %v889 = vpack.c.b16 %v791, %v789
        %v890 = vpack.c.b16 %v794, %v792
        %v891 = vpack.c.b16 %v795, %v793
        %v892 = vpack.c.b16 %v798, %v796
        %v893 = vpack.c.b16 %v799, %v797
        %v894 = vpack.c.b16 %v802, %v800
        %v895 = vpack.c.b16 %v803, %v801
        %v896 = vpack.c.b16 %v806, %v804
        %v897 = vpack.c.b16 %v807, %v805
        %v898 = vpack.c.b16 %v810, %v808
        %v899 = vpack.c.b16 %v811, %v809
        %v900 = vpack.c.b16 %v814, %v812
        %v901 = vpack.c.b16 %v815, %v813
        %v902 = vpack.c.b16 %v818, %v816
        %v903 = vpack.c.b16 %v819, %v817
        %v904 = vpack.c.b16 %v822, %v820
        %v905 = vpack.c.b16 %v823, %v821
        %v906 = vpack.c.b16 %v826, %v824
        %v907 = vpack.c.b16 %v827, %v825
        %v908 = vpack.c.b16 %v830, %v828
        %v909 = vpack.c.b16 %v831, %v829
        %v910 = vpack.c.b16 %v834, %v832
        %v911 = vpack.c.b16 %v835, %v833
        %v912 = vpack.c.b16 %v838, %v836
        %v913 = vpack.c.b16 %v839, %v837
        %v914 = vpack.c.b16 %v842, %v840
        %v915 = vpack.c.b16 %v843, %v841
        %v916 = vpack.c.b16 %v846, %v844
        %v917 = vpack.c.b16 %v847, %v845
        %v918 = vpack.c.b16 %v850, %v848
        %v919 = vpack.c.b16 %v851, %v849
        %v920 = vpack.c.b16 %v854, %v852
        %v921 = vpack.c.b16 %v855, %v853
        %v922 = vpack.c.b16 %v858, %v856
        %v923 = vpack.c.b16 %v859, %v857
        %988 = vmatprep.subr.bf16.mxu0 %v861
        %989 = vmatpush1.bf16.msra.mxu0 %v860
        %990 = vmatprep.subr.bf16.mxu0 %v863
        %991 = vmatpush1.bf16.msra.mxu0 %v862
        %992 = vmatprep.subr.bf16.mxu0 %v865
        %993 = vmatpush1.bf16.msra.mxu0 %v864
        %994 = vmatprep.subr.bf16.mxu0 %v867
        %995 = vmatpush1.bf16.msra.mxu0 %v866
        %996 = vmatprep.subr.bf16.mxu0 %v869
        %997 = vmatpush1.bf16.msra.mxu0 %v868
        %998 = vmatprep.subr.bf16.mxu0 %v871
        %999 = vmatpush1.bf16.msra.mxu0 %v870
        %1000 = vmatprep.subr.bf16.mxu0 %v873
        %1001 = vmatpush1.bf16.msra.mxu0 %v872
        %1002 = vmatprep.subr.bf16.mxu0 %v875
        %1003 = vmatpush1.bf16.msra.mxu0 %v874
        %1004 = vmatprep.subr.bf16.mxu0 %v877
        %1005 = vmatpush1.bf16.msra.mxu0 %v876
        %1006 = vmatprep.subr.bf16.mxu0 %v879
        %1007 = vmatpush1.bf16.msra.mxu0 %v878
        %1008 = vmatprep.subr.bf16.mxu0 %v881
        %1009 = vmatpush1.bf16.msra.mxu0 %v880
        %1010 = vmatprep.subr.bf16.mxu0 %v883
        %1011 = vmatpush1.bf16.msra.mxu0 %v882
        %1012 = vmatprep.subr.bf16.mxu0 %v885
        %1013 = vmatpush1.bf16.msra.mxu0 %v884
        %1014 = vmatprep.subr.bf16.mxu0 %v887
        %1015 = vmatpush1.bf16.msra.mxu0 %v886
        %1016 = vmatprep.subr.bf16.mxu0 %v889
        %1017 = vmatpush1.bf16.msra.mxu0 %v888
        %1018 = vmatprep.subr.bf16.mxu0 %v891
        %1019 = vmatpush1.bf16.msra.mxu0 %v890
        %1020 = vmatprep.mubr.bf16.mxu0 %v599
        %1021 = vmatmul.mubr.bf16.gmra.mrb[0].mxu0 %v598
        %v1022 = vpop.f32.mrb[0].mxu0
        %v1023 = vadd.f32 %v667, %v1022
        %v1024 = vpop.f32.mrb[0].mxu0
        %v1025 = vadd.f32 %v667, %v1024
        %v1026 = vpop.f32.mrb[0].mxu0
        %v1027 = vpop.f32.mrb[0].mxu0
        %1028 = vdwg.mxu0
        %1029 = vmatprep.subr.bf16.mxu0 %v893
        %1030 = vmatpush1.bf16.msra.mxu0 %v892
        %1031 = vmatprep.subr.bf16.mxu0 %v895
        %1032 = vmatpush1.bf16.msra.mxu0 %v894
        %1033 = vmatprep.subr.bf16.mxu0 %v897
        %1034 = vmatpush1.bf16.msra.mxu0 %v896
        %1035 = vmatprep.subr.bf16.mxu0 %v899
        %1036 = vmatpush1.bf16.msra.mxu0 %v898
        %1037 = vmatprep.subr.bf16.mxu0 %v901
        %1038 = vmatpush1.bf16.msra.mxu0 %v900
        %1039 = vmatprep.subr.bf16.mxu0 %v903
        %1040 = vmatpush1.bf16.msra.mxu0 %v902
        %1041 = vmatprep.subr.bf16.mxu0 %v905
        %1042 = vmatpush1.bf16.msra.mxu0 %v904
        %1043 = vmatprep.subr.bf16.mxu0 %v907
        %1044 = vmatpush1.bf16.msra.mxu0 %v906
        %1045 = vmatprep.subr.bf16.mxu0 %v909
        %1046 = vmatpush1.bf16.msra.mxu0 %v908
        %1047 = vmatprep.subr.bf16.mxu0 %v911
        %1048 = vmatpush1.bf16.msra.mxu0 %v910
        %1049 = vmatprep.subr.bf16.mxu0 %v913
        %1050 = vmatpush1.bf16.msra.mxu0 %v912
        %1051 = vmatprep.subr.bf16.mxu0 %v915
        %1052 = vmatpush1.bf16.msra.mxu0 %v914
        %1053 = vmatprep.subr.bf16.mxu0 %v917
        %1054 = vmatpush1.bf16.msra.mxu0 %v916
        %1055 = vmatprep.subr.bf16.mxu0 %v919
        %1056 = vmatpush1.bf16.msra.mxu0 %v918
        %1057 = vmatprep.subr.bf16.mxu0 %v921
        %1058 = vmatpush1.bf16.msra.mxu0 %v920
        %1059 = vmatprep.subr.bf16.mxu0 %v923
        %1060 = vmatpush1.bf16.msra.mxu0 %v922
        %1061 = vmatprep.mubr.bf16.mxu0 %v601
        %1062 = vmatmul.mubr.bf16.gmra.mrb[0].mxu0 %v600
        %v1063 = vpop.f32.mrb[0].mxu0
        %v1064 = vadd.f32 %v1023, %v1063
        %v1065 = vpop.f32.mrb[0].mxu0
        %v1066 = vadd.f32 %v1025, %v1065
        %v1067 = vpop.f32.mrb[0].mxu0
        %v1068 = vpop.f32.mrb[0].mxu0
        %1069 = vdwg.mxu0
        %v1070 = vxor.u32 %v1064, 2147483648
        %v1071 = vxor.u32 %v1066, 2147483648
        %v1072 = vmul.f32 %v1070, 1.442695
        %v1073 = vpow.pop %v1072
        %v1074 = vmul.f32 %v1071, 1.442695
        %v1075 = vpow.pop %v1074
        %v1076 = vadd.f32 %v1073, 1.0
        %v1077 = vadd.f32 %v1075, 1.0
        %v1078 = vrcp.pop %v1076
        %v1079 = vmul.f32 1.0, %v1078
        %v1080 = vrcp.pop %v1077
        %v1081 = vmul.f32 1.0, %v1080
        %v1082 = vlaneseq
        %v1083 = vshrl.u32 %v1082, 7
        %v1084 = vsub.s32 0, %v1083
        %v1085 = vrot.slane %v1079, %v1084
        %v1086 = vlaneseq
        %v1087 = vshrl.u32 %v1086, 7
        %v1088 = vsub.s32 0, %v1087
        %v1089 = vrot.slane %v1081, %v1088
        %v1090 = vmul.f32 %v552, %v1085
        %v1091 = vmul.f32 %v553, %v1089
        %v1092 = vmul.f32 %v554, %v1085
        %v1093 = vmul.f32 %v555, %v1089
        %v1094 = vmul.f32 %v556, %v1085
        %v1095 = vmul.f32 %v557, %v1089
        %v1096 = vmul.f32 %v558, %v1085
        %v1097 = vmul.f32 %v559, %v1089
        %1098 = vst [vmem:[%s258] sm:$0xff] %v1090
        %1099 = vst [vmem:[%s258 + $0x8] sm:$0xff] %v1091
        %1100 = vst [vmem:[%s258 + $0x10] sm:$0xff] %v1092
        %1101 = vst [vmem:[%s258 + $0x18] sm:$0xff] %v1093
        %1102 = vst [vmem:[%s258 + $0x20] sm:$0xff] %v1094
        %1103 = vst [vmem:[%s258 + $0x28] sm:$0xff] %v1095
        %1104 = vst [vmem:[%s258 + $0x30] sm:$0xff] %v1096
        %1105 = vst [vmem:[%s258 + $0x38] sm:$0xff] %v1097
        %s1106 = sand.u32 %s142, 1
        %s1107 = scalar_lea.sflag [#allocation5], %s1106
        %s1108 = sand.u32 %s142, 1
        %s1109 = smul.addr %s1108, 64
        %s1110 = scalar_lea.vmem [#allocation8], %s1109
        // Predicated region
        $region49: #{tpu_custom_call.1} parent=39 // pred_check
          %p1111 = pneg %p152
        $region50: #{tpu_custom_call.1} parent=39 // pred_check_branch
          %1113 = sbr.rel (%p1111) target = $region52
        $region51: #{tpu_custom_call.1} parent=39 // pred_region
          %s1115 = ssub.s32 1024, 1024
          %1116 = vsyncadd %s1107, %s1115
          %s1117 = smul.addr %s24, 8
          %s1118 = smul.addr %s1117, 128
          %s1119 = scalar_lea.hbm %s5, %s1118
          %s1120 = sshll.u32 %s1110, 4
          %s1121 = int_to_ptr.vmem [resolvable:$true] %s1120
          %1126 = dma.vmem_to_hbm [thread:$0]  %s1121, 1024, %s1119, %s1107, 256, 256, 16
        $region52: #{tpu_custom_call.1} parent=39 // pred_fallthru
          _
      $region40: #{tpu_custom_call.1} parent=5 // pred_fallthru
        _
      %p1127 = scmp.le.s32.totalorder 2, %s19
      // Predicated region
      $region53: #{tpu_custom_call.1} parent=5 // pred_check
        %p1128 = pneg %p1127
      $region54: #{tpu_custom_call.1} parent=5 // pred_check_branch
        %1130 = sbr.rel (%p1128) target = $region56
      $region55: #{tpu_custom_call.1} parent=5 // pred_region
        %s1131 = ssub.s32 %s19, 2
        // Predicated region
        $region57: #{tpu_custom_call.1} parent=55 // pred_check
          %p1132 = pneg %p158
        $region58: #{tpu_custom_call.1} parent=55 // pred_check_branch
          %1134 = sbr.rel (%p1132) target = $region60
        $region59: #{tpu_custom_call.1} parent=55 // pred_region
          %s1135 = sand.u32 %s143, 1
          %s1136 = scalar_lea.sflag [#allocation5], %s1135
          %s1137 = sand.u32 %s143, 1
          %s1138 = smul.addr %s1137, 64
          %s1139 = scalar_lea.vmem [#allocation8], %s1138
          %1140 = dma.done %s1136, 1024
        $region60: #{tpu_custom_call.1} parent=55 // pred_fallthru
          _
      $region56: #{tpu_custom_call.1} parent=5 // pred_fallthru
        _
    $region6: #{tpu_custom_call.1} parent=1 // loop_footer
      %s23 = sadd.s32 1, %s19
    $region7: #{tpu_custom_call.1} parent=1 // loop_footer_branch
      %18 = sbr.rel target = $region3
    $region8: #{tpu_custom_call.1} parent=1 // loop_exit
      _
    %1141 = vsyncpa [#allocation4], 1
    %s1142 = scalar_lea.sflag [#allocation4], 1
    %1143 = vsyncpa %s1142, 1
    %1144 = vsyncpa [#allocation7], 1
    %1145 = vsyncpa [#allocation5], 1
    %s1146 = scalar_lea.sflag [#allocation5], 1
    %1147 = vsyncpa %s1146, 1

</llo_original>
